<compile_context>
chip_gen: v7x
topology: tpu7x:2x2x1
jax: 0.10.0
libtpu: 0.0.40
codegen_flags: <defaults>
</compile_context>

<pallas_src>
import functools
import math

import jax
import jax.numpy as jnp
from jax import lax
from jax.experimental import pallas as pl
from jax.experimental.pallas import tpu as pltpu


def _gather_embed_kernel(ids_ref, table_hbm, out_ref, rows_vmem, sems, *,
                         scale: float, token_block: int, vocab: int):
    """Double-buffered embedding-row gather + sqrt(d_model) scale.

    ids_ref:   (n_chunk,) int32 in SMEM (scalar prefetch, whole chunk visible).
    table_hbm: (vocab, d_model) in HBM (pl.ANY) -- manually DMA'd per row.
    out_ref:   (token_block, d_model) output tile in VMEM.
    rows_vmem: (2, token_block, d_model) VMEM gather buffers (slot per grid-step parity).
    sems:      (2,) DMA semaphores, one per buffer slot (all row copies of a block
               target the slot's semaphore; waited once with a slab-sized descriptor).
    """
    step = pl.program_id(0)
    nsteps = pl.num_programs(0)
    slot = lax.rem(step, 2)
    next_slot = 1 - slot

    def issue_block(block_idx, buf_slot):
        base = block_idx * token_block

        def body(t, carry):
            # Clamp ids (JAX gather semantics) so a bad id can never DMA out of bounds.
            tok = jnp.clip(ids_ref[base + t], 0, vocab - 1)
            pltpu.make_async_copy(
                table_hbm.at[tok], rows_vmem.at[buf_slot, t], sems.at[buf_slot]
            ).start()
            return carry

        # Unrolled so scalar id loads / address math co-issue with DMA descriptor pushes.
        lax.fori_loop(0, token_block, body, 0, unroll=8)

    # First grid step: prime this block's gather (later blocks are issued a step ahead).
    @pl.when(step == 0)
    def _prime():
        issue_block(step, slot)

    # Prefetch the next block's rows into the other slot (its ids are already in SMEM).
    @pl.when(step + 1 < nsteps)
    def _prefetch_next():
        issue_block(step + 1, next_slot)

    # Single aggregate wait: DMA semaphores count bytes, so waiting with a descriptor
    # sized to the full (token_block, d_model) slab consumes exactly the token_block
    # row copies issued for this slot. (Only dst shape + semaphore matter for .wait().)
    pltpu.make_async_copy(rows_vmem.at[slot], rows_vmem.at[slot], sems.at[slot]).wait()

    # Fused scale (in f32) + cast + lane-dense store of the whole tile.
    rows = rows_vmem[slot].astype(jnp.float32) * jnp.float32(scale)
    out_ref[...] = rows.astype(out_ref.dtype)


def token_embeddings(ids: jax.Array, table: jax.Array, *, token_block: int = 512) -> jax.Array:
    """ids: (batch, seq) int; table: (vocab, d_model) float -> (batch, seq, d_model).

    Matches nn.Embedding(..., padding_idx=0)(ids) * sqrt(d_model), assuming the caller
    keeps table[0] == 0. Out-of-range ids are clamped instead of raising.
    """
    batch, seq = ids.shape
    vocab, d_model = table.shape
    dtype = table.dtype
    dtype_bytes = jnp.dtype(dtype).itemsize
    scale = math.sqrt(d_model)

    n = batch * seq

    # ---- tile sizing ------------------------------------------------------
    # VMEM footprint ~= (2 gather slots + 2 pipelined out buffers) * tb * d_model * bytes.
    # Cap it at ~24 MiB so it fits every generation's scoped-VMEM budget with headroom
    # (v5e/v6e 128 MiB physical, v7x 64 MiB physical).
    vmem_budget = 24 * 1024 * 1024
    max_tb = max(8, ((vmem_budget // (4 * d_model * dtype_bytes)) // 8) * 8)
    token_block = int(min(token_block, max_tb))
    # Tiny inputs: shrink the block so the grid has >= 2 steps (pipeline actually overlaps).
    if n <= token_block:
        token_block = int(max(8, ((pl.cdiv(n, 2) + 7) // 8) * 8))

    n_pad = int(pl.cdiv(n, token_block)) * token_block
    ids_flat = ids.reshape(n).astype(jnp.int32)
    if n_pad != n:
        # Pad with token 0 (the padding index); padded rows are sliced off below.
        ids_flat = jnp.pad(ids_flat, (0, n_pad - n))

    kernel = functools.partial(
        _gather_embed_kernel, scale=scale, token_block=token_block, vocab=vocab)

    def run_chunk(ids_chunk):
        m = ids_chunk.shape[0]
        cost = pl.CostEstimate(
            flops=m * d_model,
            transcendentals=0,
            bytes_accessed=2 * m * d_model * dtype_bytes + m * 4)
        return pl.pallas_call(
            kernel,
            out_shape=jax.ShapeDtypeStruct((m, d_model), dtype),
            grid_spec=pltpu.PrefetchScalarGridSpec(
                num_scalar_prefetch=1,                       # ids -> SMEM, drive the DMA gather
                grid=(m // token_block,),
                in_specs=[pl.BlockSpec(memory_space=pl.ANY)],  # table stays in HBM
                out_specs=pl.BlockSpec((token_block, d_model), lambda i, ids: (i, 0)),
                scratch_shapes=[
                    pltpu.VMEM((2, token_block, d_model), dtype),   # double-buffered gather slabs
                    pltpu.SemaphoreType.DMA((2,)),                   # one aggregate sem per slot
                ],
            ),
            compiler_params=pltpu.CompilerParams(
                # Sequential: step i consumes DMAs issued at step i-1 (cross-step pipeline).
                dimension_semantics=("arbitrary",),
                vmem_limit_bytes=48 * 1024 * 1024,
            ),
            cost_estimate=cost,
        )(ids_chunk, table)

    # SMEM guard: 1-D scalar-prefetch arrays pad to next_pow2(4N) bytes, so chunk very long
    # batch*seq into <= 64K-token calls (<= 256 KiB of SMEM for ids each).
    max_ids_per_call = max(token_block, (65536 // token_block) * token_block)
    if n_pad <= max_ids_per_call:
        out_flat = run_chunk(ids_flat)
    else:
        outs = [run_chunk(ids_flat[s:s + max_ids_per_call])
                for s in range(0, n_pad, max_ids_per_call)]
        out_flat = jnp.concatenate(outs, axis=0)

    return out_flat[:n].reshape(batch, seq, d_model)


if __name__ == "__main__":
    # Small shapes consistent with the module's forward: ids (batch, seq) -> (batch, seq, d_model)
    batch, seq = 2, 8
    d_model, vocab_size = 128, 64

    key = jax.random.PRNGKey(0)
    k_emb, k_ids = jax.random.split(key)

    # Deterministic parameter init; zero row 0 to honor padding_idx=0 (forward semantics).
    table = jax.random.normal(k_emb, (vocab_size, d_model), dtype=jnp.float32)
    table = table.at[0].set(0.0)

    ids = jax.random.randint(k_ids, (batch, seq), minval=0, maxval=vocab_size, dtype=jnp.int32)

    out = jax.block_until_ready(token_embeddings(ids, table))

    # Reference: plain JAX gather + scale, same as nn.Embedding(padding_idx=0)(ids) * sqrt(d)
    ref = jnp.take(table, ids, axis=0) * math.sqrt(d_model)
    assert out.shape == (batch, seq, d_model)
    assert jnp.allclose(out, ref, atol=1e-5, rtol=1e-5)

    print("KERNEL_OK")
</pallas_src>

<mosaic_0001>
module attributes {stable_mosaic.version = 11 : i64} {
  func.func @_gather_embed_kernel(%arg0: i32, %arg1: memref<16xi32, #tpu.memory_space<smem>>, %arg2: memref<64x128xf32, #tpu.memory_space<any>>, %arg3: memref<8x128xf32, #tpu.memory_space<vmem>>, %arg4: memref<2x8x128xf32, #tpu.memory_space<vmem>>, %arg5: memref<2x!tpu.dma_semaphore, #tpu.memory_space<semaphore_mem>>) attributes {dimension_semantics = [#tpu.dimension_semantics<arbitrary>], iteration_bounds = array<i64: 2>, scalar_prefetch = 1 : i64, scratch_operands = 2 : i64, tpu.core_type = #tpu.core_type<tc>, window_params = [{}, {transform_indices = @transform_1, window_bounds = array<i64: 8, 128>}]} {
    %c2_i32 = arith.constant 2 : i32
    %0 = arith.remsi %arg0, %c2_i32 : i32
    %c1_i32 = arith.constant 1 : i32
    %1 = arith.subi %c1_i32, %0 : i32
    %c0_i32 = arith.constant 0 : i32
    %2 = arith.cmpi eq, %arg0, %c0_i32 : i32
    %3 = arith.extui %2 : i1 to i32
    %c0_i32_0 = arith.constant 0 : i32
    %4 = arith.cmpi ne, %3, %c0_i32_0 : i32
    scf.if %4 {
      %c8_i32 = arith.constant 8 : i32
      %21 = arith.muli %arg0, %c8_i32 : i32
      %c0_i32_11 = arith.constant 0 : i32
      %22 = arith.addi %21, %c0_i32_11 : i32
      %23 = arith.index_cast %22 : i32 to index
      %24 = memref.load %arg1[%23] : memref<16xi32, #tpu.memory_space<smem>>
      %c0_i32_12 = arith.constant 0 : i32
      %c63_i32 = arith.constant 63 : i32
      %25 = arith.maxsi %c0_i32_12, %24 : i32
      %26 = arith.minsi %c63_i32, %25 : i32
      %c0_i32_13 = arith.constant 0 : i32
      %27 = tpu.memref_slice %arg2[%26, %c0_i32_13] : memref<64x128xf32, #tpu.memory_space<any>> -> memref<1x128xf32, #tpu.memory_space<any>>
      %28 = tpu.memref_squeeze %27 : memref<1x128xf32, #tpu.memory_space<any>> -> memref<128xf32, #tpu.memory_space<any>>
      %c0_i32_14 = arith.constant 0 : i32
      %29 = tpu.memref_slice %arg4[%0, %c0_i32_11, %c0_i32_14] : memref<2x8x128xf32, #tpu.memory_space<vmem>> -> memref<1x1x128xf32, #tpu.memory_space<vmem>>
      %30 = tpu.memref_squeeze %29 : memref<1x1x128xf32, #tpu.memory_space<vmem>> -> memref<128xf32, #tpu.memory_space<vmem>>
      %31 = tpu.memref_slice %arg5[%0] : memref<2x!tpu.dma_semaphore, #tpu.memory_space<semaphore_mem>> -> memref<1x!tpu.dma_semaphore, #tpu.memory_space<semaphore_mem>>
      %32 = tpu.memref_squeeze %31 : memref<1x!tpu.dma_semaphore, #tpu.memory_space<semaphore_mem>> -> memref<!tpu.dma_semaphore, #tpu.memory_space<semaphore_mem>>
      tpu.enqueue_dma source(%28 : memref<128xf32, #tpu.memory_space<any>>) target(%30 : memref<128xf32, #tpu.memory_space<vmem>>) target_semaphore(%32 : memref<!tpu.dma_semaphore, #tpu.memory_space<semaphore_mem>>)
      %c1_i32_15 = arith.constant 1 : i32
      %33 = arith.addi %21, %c1_i32_15 : i32
      %34 = arith.index_cast %33 : i32 to index
      %35 = memref.load %arg1[%34] : memref<16xi32, #tpu.memory_space<smem>>
      %c0_i32_16 = arith.constant 0 : i32
      %c63_i32_17 = arith.constant 63 : i32
      %36 = arith.maxsi %c0_i32_16, %35 : i32
      %37 = arith.minsi %c63_i32_17, %36 : i32
      %c0_i32_18 = arith.constant 0 : i32
      %38 = tpu.memref_slice %arg2[%37, %c0_i32_18] : memref<64x128xf32, #tpu.memory_space<any>> -> memref<1x128xf32, #tpu.memory_space<any>>
      %39 = tpu.memref_squeeze %38 : memref<1x128xf32, #tpu.memory_space<any>> -> memref<128xf32, #tpu.memory_space<any>>
      %c0_i32_19 = arith.constant 0 : i32
      %40 = tpu.memref_slice %arg4[%0, %c1_i32_15, %c0_i32_19] : memref<2x8x128xf32, #tpu.memory_space<vmem>> -> memref<1x1x128xf32, #tpu.memory_space<vmem>>
      %41 = tpu.memref_squeeze %40 : memref<1x1x128xf32, #tpu.memory_space<vmem>> -> memref<128xf32, #tpu.memory_space<vmem>>
      %42 = tpu.memref_slice %arg5[%0] : memref<2x!tpu.dma_semaphore, #tpu.memory_space<semaphore_mem>> -> memref<1x!tpu.dma_semaphore, #tpu.memory_space<semaphore_mem>>
      %43 = tpu.memref_squeeze %42 : memref<1x!tpu.dma_semaphore, #tpu.memory_space<semaphore_mem>> -> memref<!tpu.dma_semaphore, #tpu.memory_space<semaphore_mem>>
      tpu.enqueue_dma source(%39 : memref<128xf32, #tpu.memory_space<any>>) target(%41 : memref<128xf32, #tpu.memory_space<vmem>>) target_semaphore(%43 : memref<!tpu.dma_semaphore, #tpu.memory_space<semaphore_mem>>)
      %c2_i32_20 = arith.constant 2 : i32
      %44 = arith.addi %21, %c2_i32_20 : i32
      %45 = arith.index_cast %44 : i32 to index
      %46 = memref.load %arg1[%45] : memref<16xi32, #tpu.memory_space<smem>>
      %c0_i32_21 = arith.constant 0 : i32
      %c63_i32_22 = arith.constant 63 : i32
      %47 = arith.maxsi %c0_i32_21, %46 : i32
      %48 = arith.minsi %c63_i32_22, %47 : i32
      %c0_i32_23 = arith.constant 0 : i32
      %49 = tpu.memref_slice %arg2[%48, %c0_i32_23] : memref<64x128xf32, #tpu.memory_space<any>> -> memref<1x128xf32, #tpu.memory_space<any>>
      %50 = tpu.memref_squeeze %49 : memref<1x128xf32, #tpu.memory_space<any>> -> memref<128xf32, #tpu.memory_space<any>>
      %c0_i32_24 = arith.constant 0 : i32
      %51 = tpu.memref_slice %arg4[%0, %c2_i32_20, %c0_i32_24] : memref<2x8x128xf32, #tpu.memory_space<vmem>> -> memref<1x1x128xf32, #tpu.memory_space<vmem>>
      %52 = tpu.memref_squeeze %51 : memref<1x1x128xf32, #tpu.memory_space<vmem>> -> memref<128xf32, #tpu.memory_space<vmem>>
      %53 = tpu.memref_slice %arg5[%0] : memref<2x!tpu.dma_semaphore, #tpu.memory_space<semaphore_mem>> -> memref<1x!tpu.dma_semaphore, #tpu.memory_space<semaphore_mem>>
      %54 = tpu.memref_squeeze %53 : memref<1x!tpu.dma_semaphore, #tpu.memory_space<semaphore_mem>> -> memref<!tpu.dma_semaphore, #tpu.memory_space<semaphore_mem>>
      tpu.enqueue_dma source(%50 : memref<128xf32, #tpu.memory_space<any>>) target(%52 : memref<128xf32, #tpu.memory_space<vmem>>) target_semaphore(%54 : memref<!tpu.dma_semaphore, #tpu.memory_space<semaphore_mem>>)
      %c3_i32 = arith.constant 3 : i32
      %55 = arith.addi %21, %c3_i32 : i32
      %56 = arith.index_cast %55 : i32 to index
      %57 = memref.load %arg1[%56] : memref<16xi32, #tpu.memory_space<smem>>
      %c0_i32_25 = arith.constant 0 : i32
      %c63_i32_26 = arith.constant 63 : i32
      %58 = arith.maxsi %c0_i32_25, %57 : i32
      %59 = arith.minsi %c63_i32_26, %58 : i32
      %c0_i32_27 = arith.constant 0 : i32
      %60 = tpu.memref_slice %arg2[%59, %c0_i32_27] : memref<64x128xf32, #tpu.memory_space<any>> -> memref<1x128xf32, #tpu.memory_space<any>>
      %61 = tpu.memref_squeeze %60 : memref<1x128xf32, #tpu.memory_space<any>> -> memref<128xf32, #tpu.memory_space<any>>
      %c0_i32_28 = arith.constant 0 : i32
      %62 = tpu.memref_slice %arg4[%0, %c3_i32, %c0_i32_28] : memref<2x8x128xf32, #tpu.memory_space<vmem>> -> memref<1x1x128xf32, #tpu.memory_space<vmem>>
      %63 = tpu.memref_squeeze %62 : memref<1x1x128xf32, #tpu.memory_space<vmem>> -> memref<128xf32, #tpu.memory_space<vmem>>
      %64 = tpu.memref_slice %arg5[%0] : memref<2x!tpu.dma_semaphore, #tpu.memory_space<semaphore_mem>> -> memref<1x!tpu.dma_semaphore, #tpu.memory_space<semaphore_mem>>
      %65 = tpu.memref_squeeze %64 : memref<1x!tpu.dma_semaphore, #tpu.memory_space<semaphore_mem>> -> memref<!tpu.dma_semaphore, #tpu.memory_space<semaphore_mem>>
      tpu.enqueue_dma source(%61 : memref<128xf32, #tpu.memory_space<any>>) target(%63 : memref<128xf32, #tpu.memory_space<vmem>>) target_semaphore(%65 : memref<!tpu.dma_semaphore, #tpu.memory_space<semaphore_mem>>)
      %c4_i32 = arith.constant 4 : i32
      %66 = arith.addi %21, %c4_i32 : i32
      %67 = arith.index_cast %66 : i32 to index
      %68 = memref.load %arg1[%67] : memref<16xi32, #tpu.memory_space<smem>>
      %c0_i32_29 = arith.constant 0 : i32
      %c63_i32_30 = arith.constant 63 : i32
      %69 = arith.maxsi %c0_i32_29, %68 : i32
      %70 = arith.minsi %c63_i32_30, %69 : i32
      %c0_i32_31 = arith.constant 0 : i32
      %71 = tpu.memref_slice %arg2[%70, %c0_i32_31] : memref<64x128xf32, #tpu.memory_space<any>> -> memref<1x128xf32, #tpu.memory_space<any>>
      %72 = tpu.memref_squeeze %71 : memref<1x128xf32, #tpu.memory_space<any>> -> memref<128xf32, #tpu.memory_space<any>>
      %c0_i32_32 = arith.constant 0 : i32
      %73 = tpu.memref_slice %arg4[%0, %c4_i32, %c0_i32_32] : memref<2x8x128xf32, #tpu.memory_space<vmem>> -> memref<1x1x128xf32, #tpu.memory_space<vmem>>
      %74 = tpu.memref_squeeze %73 : memref<1x1x128xf32, #tpu.memory_space<vmem>> -> memref<128xf32, #tpu.memory_space<vmem>>
      %75 = tpu.memref_slice %arg5[%0] : memref<2x!tpu.dma_semaphore, #tpu.memory_space<semaphore_mem>> -> memref<1x!tpu.dma_semaphore, #tpu.memory_space<semaphore_mem>>
      %76 = tpu.memref_squeeze %75 : memref<1x!tpu.dma_semaphore, #tpu.memory_space<semaphore_mem>> -> memref<!tpu.dma_semaphore, #tpu.memory_space<semaphore_mem>>
      tpu.enqueue_dma source(%72 : memref<128xf32, #tpu.memory_space<any>>) target(%74 : memref<128xf32, #tpu.memory_space<vmem>>) target_semaphore(%76 : memref<!tpu.dma_semaphore, #tpu.memory_space<semaphore_mem>>)
      %c5_i32 = arith.constant 5 : i32
      %77 = arith.addi %21, %c5_i32 : i32
      %78 = arith.index_cast %77 : i32 to index
      %79 = memref.load %arg1[%78] : memref<16xi32, #tpu.memory_space<smem>>
      %c0_i32_33 = arith.constant 0 : i32
      %c63_i32_34 = arith.constant 63 : i32
      %80 = arith.maxsi %c0_i32_33, %79 : i32
      %81 = arith.minsi %c63_i32_34, %80 : i32
      %c0_i32_35 = arith.constant 0 : i32
      %82 = tpu.memref_slice %arg2[%81, %c0_i32_35] : memref<64x128xf32, #tpu.memory_space<any>> -> memref<1x128xf32, #tpu.memory_space<any>>
      %83 = tpu.memref_squeeze %82 : memref<1x128xf32, #tpu.memory_space<any>> -> memref<128xf32, #tpu.memory_space<any>>
      %c0_i32_36 = arith.constant 0 : i32
      %84 = tpu.memref_slice %arg4[%0, %c5_i32, %c0_i32_36] : memref<2x8x128xf32, #tpu.memory_space<vmem>> -> memref<1x1x128xf32, #tpu.memory_space<vmem>>
      %85 = tpu.memref_squeeze %84 : memref<1x1x128xf32, #tpu.memory_space<vmem>> -> memref<128xf32, #tpu.memory_space<vmem>>
      %86 = tpu.memref_slice %arg5[%0] : memref<2x!tpu.dma_semaphore, #tpu.memory_space<semaphore_mem>> -> memref<1x!tpu.dma_semaphore, #tpu.memory_space<semaphore_mem>>
      %87 = tpu.memref_squeeze %86 : memref<1x!tpu.dma_semaphore, #tpu.memory_space<semaphore_mem>> -> memref<!tpu.dma_semaphore, #tpu.memory_space<semaphore_mem>>
      tpu.enqueue_dma source(%83 : memref<128xf32, #tpu.memory_space<any>>) target(%85 : memref<128xf32, #tpu.memory_space<vmem>>) target_semaphore(%87 : memref<!tpu.dma_semaphore, #tpu.memory_space<semaphore_mem>>)
      %c6_i32 = arith.constant 6 : i32
      %88 = arith.addi %21, %c6_i32 : i32
      %89 = arith.index_cast %88 : i32 to index
      %90 = memref.load %arg1[%89] : memref<16xi32, #tpu.memory_space<smem>>
      %c0_i32_37 = arith.constant 0 : i32
      %c63_i32_38 = arith.constant 63 : i32
      %91 = arith.maxsi %c0_i32_37, %90 : i32
      %92 = arith.minsi %c63_i32_38, %91 : i32
      %c0_i32_39 = arith.constant 0 : i32
      %93 = tpu.memref_slice %arg2[%92, %c0_i32_39] : memref<64x128xf32, #tpu.memory_space<any>> -> memref<1x128xf32, #tpu.memory_space<any>>
      %94 = tpu.memref_squeeze %93 : memref<1x128xf32, #tpu.memory_space<any>> -> memref<128xf32, #tpu.memory_space<any>>
      %c0_i32_40 = arith.constant 0 : i32
      %95 = tpu.memref_slice %arg4[%0, %c6_i32, %c0_i32_40] : memref<2x8x128xf32, #tpu.memory_space<vmem>> -> memref<1x1x128xf32, #tpu.memory_space<vmem>>
      %96 = tpu.memref_squeeze %95 : memref<1x1x128xf32, #tpu.memory_space<vmem>> -> memref<128xf32, #tpu.memory_space<vmem>>
      %97 = tpu.memref_slice %arg5[%0] : memref<2x!tpu.dma_semaphore, #tpu.memory_space<semaphore_mem>> -> memref<1x!tpu.dma_semaphore, #tpu.memory_space<semaphore_mem>>
      %98 = tpu.memref_squeeze %97 : memref<1x!tpu.dma_semaphore, #tpu.memory_space<semaphore_mem>> -> memref<!tpu.dma_semaphore, #tpu.memory_space<semaphore_mem>>
      tpu.enqueue_dma source(%94 : memref<128xf32, #tpu.memory_space<any>>) target(%96 : memref<128xf32, #tpu.memory_space<vmem>>) target_semaphore(%98 : memref<!tpu.dma_semaphore, #tpu.memory_space<semaphore_mem>>)
      %c7_i32 = arith.constant 7 : i32
      %99 = arith.addi %21, %c7_i32 : i32
      %100 = arith.index_cast %99 : i32 to index
      %101 = memref.load %arg1[%100] : memref<16xi32, #tpu.memory_space<smem>>
      %c0_i32_41 = arith.constant 0 : i32
      %c63_i32_42 = arith.constant 63 : i32
      %102 = arith.maxsi %c0_i32_41, %101 : i32
      %103 = arith.minsi %c63_i32_42, %102 : i32
      %c0_i32_43 = arith.constant 0 : i32
      %104 = tpu.memref_slice %arg2[%103, %c0_i32_43] : memref<64x128xf32, #tpu.memory_space<any>> -> memref<1x128xf32, #tpu.memory_space<any>>
      %105 = tpu.memref_squeeze %104 : memref<1x128xf32, #tpu.memory_space<any>> -> memref<128xf32, #tpu.memory_space<any>>
      %c0_i32_44 = arith.constant 0 : i32
      %106 = tpu.memref_slice %arg4[%0, %c7_i32, %c0_i32_44] : memref<2x8x128xf32, #tpu.memory_space<vmem>> -> memref<1x1x128xf32, #tpu.memory_space<vmem>>
      %107 = tpu.memref_squeeze %106 : memref<1x1x128xf32, #tpu.memory_space<vmem>> -> memref<128xf32, #tpu.memory_space<vmem>>
      %108 = tpu.memref_slice %arg5[%0] : memref<2x!tpu.dma_semaphore, #tpu.memory_space<semaphore_mem>> -> memref<1x!tpu.dma_semaphore, #tpu.memory_space<semaphore_mem>>
      %109 = tpu.memref_squeeze %108 : memref<1x!tpu.dma_semaphore, #tpu.memory_space<semaphore_mem>> -> memref<!tpu.dma_semaphore, #tpu.memory_space<semaphore_mem>>
      tpu.enqueue_dma source(%105 : memref<128xf32, #tpu.memory_space<any>>) target(%107 : memref<128xf32, #tpu.memory_space<vmem>>) target_semaphore(%109 : memref<!tpu.dma_semaphore, #tpu.memory_space<semaphore_mem>>)
      %c8_i32_45 = arith.constant 8 : i32
    } else {
    }
    %c1_i32_1 = arith.constant 1 : i32
    %5 = arith.addi %arg0, %c1_i32_1 : i32
    %c2_i32_2 = arith.constant 2 : i32
    %6 = arith.cmpi slt, %5, %c2_i32_2 : i32
    %7 = arith.extui %6 : i1 to i32
    %c0_i32_3 = arith.constant 0 : i32
    %8 = arith.cmpi ne, %7, %c0_i32_3 : i32
    scf.if %8 {
      %c1_i32_11 = arith.constant 1 : i32
      %21 = arith.addi %arg0, %c1_i32_11 : i32
      %c8_i32 = arith.constant 8 : i32
      %22 = arith.muli %21, %c8_i32 : i32
      %c0_i32_12 = arith.constant 0 : i32
      %23 = arith.addi %22, %c0_i32_12 : i32
      %24 = arith.index_cast %23 : i32 to index
      %25 = memref.load %arg1[%24] : memref<16xi32, #tpu.memory_space<smem>>
      %c0_i32_13 = arith.constant 0 : i32
      %c63_i32 = arith.constant 63 : i32
      %26 = arith.maxsi %c0_i32_13, %25 : i32
      %27 = arith.minsi %c63_i32, %26 : i32
      %c0_i32_14 = arith.constant 0 : i32
      %28 = tpu.memref_slice %arg2[%27, %c0_i32_14] : memref<64x128xf32, #tpu.memory_space<any>> -> memref<1x128xf32, #tpu.memory_space<any>>
      %29 = tpu.memref_squeeze %28 : memref<1x128xf32, #tpu.memory_space<any>> -> memref<128xf32, #tpu.memory_space<any>>
      %c0_i32_15 = arith.constant 0 : i32
      %30 = tpu.memref_slice %arg4[%1, %c0_i32_12, %c0_i32_15] : memref<2x8x128xf32, #tpu.memory_space<vmem>> -> memref<1x1x128xf32, #tpu.memory_space<vmem>>
      %31 = tpu.memref_squeeze %30 : memref<1x1x128xf32, #tpu.memory_space<vmem>> -> memref<128xf32, #tpu.memory_space<vmem>>
      %32 = tpu.memref_slice %arg5[%1] : memref<2x!tpu.dma_semaphore, #tpu.memory_space<semaphore_mem>> -> memref<1x!tpu.dma_semaphore, #tpu.memory_space<semaphore_mem>>
      %33 = tpu.memref_squeeze %32 : memref<1x!tpu.dma_semaphore, #tpu.memory_space<semaphore_mem>> -> memref<!tpu.dma_semaphore, #tpu.memory_space<semaphore_mem>>
      tpu.enqueue_dma source(%29 : memref<128xf32, #tpu.memory_space<any>>) target(%31 : memref<128xf32, #tpu.memory_space<vmem>>) target_semaphore(%33 : memref<!tpu.dma_semaphore, #tpu.memory_space<semaphore_mem>>)
      %c1_i32_16 = arith.constant 1 : i32
      %34 = arith.addi %22, %c1_i32_16 : i32
      %35 = arith.index_cast %34 : i32 to index
      %36 = memref.load %arg1[%35] : memref<16xi32, #tpu.memory_space<smem>>
      %c0_i32_17 = arith.constant 0 : i32
      %c63_i32_18 = arith.constant 63 : i32
      %37 = arith.maxsi %c0_i32_17, %36 : i32
      %38 = arith.minsi %c63_i32_18, %37 : i32
      %c0_i32_19 = arith.constant 0 : i32
      %39 = tpu.memref_slice %arg2[%38, %c0_i32_19] : memref<64x128xf32, #tpu.memory_space<any>> -> memref<1x128xf32, #tpu.memory_space<any>>
      %40 = tpu.memref_squeeze %39 : memref<1x128xf32, #tpu.memory_space<any>> -> memref<128xf32, #tpu.memory_space<any>>
      %c0_i32_20 = arith.constant 0 : i32
      %41 = tpu.memref_slice %arg4[%1, %c1_i32_16, %c0_i32_20] : memref<2x8x128xf32, #tpu.memory_space<vmem>> -> memref<1x1x128xf32, #tpu.memory_space<vmem>>
      %42 = tpu.memref_squeeze %41 : memref<1x1x128xf32, #tpu.memory_space<vmem>> -> memref<128xf32, #tpu.memory_space<vmem>>
      %43 = tpu.memref_slice %arg5[%1] : memref<2x!tpu.dma_semaphore, #tpu.memory_space<semaphore_mem>> -> memref<1x!tpu.dma_semaphore, #tpu.memory_space<semaphore_mem>>
      %44 = tpu.memref_squeeze %43 : memref<1x!tpu.dma_semaphore, #tpu.memory_space<semaphore_mem>> -> memref<!tpu.dma_semaphore, #tpu.memory_space<semaphore_mem>>
      tpu.enqueue_dma source(%40 : memref<128xf32, #tpu.memory_space<any>>) target(%42 : memref<128xf32, #tpu.memory_space<vmem>>) target_semaphore(%44 : memref<!tpu.dma_semaphore, #tpu.memory_space<semaphore_mem>>)
      %c2_i32_21 = arith.constant 2 : i32
      %45 = arith.addi %22, %c2_i32_21 : i32
      %46 = arith.index_cast %45 : i32 to index
      %47 = memref.load %arg1[%46] : memref<16xi32, #tpu.memory_space<smem>>
      %c0_i32_22 = arith.constant 0 : i32
      %c63_i32_23 = arith.constant 63 : i32
      %48 = arith.maxsi %c0_i32_22, %47 : i32
      %49 = arith.minsi %c63_i32_23, %48 : i32
      %c0_i32_24 = arith.constant 0 : i32
      %50 = tpu.memref_slice %arg2[%49, %c0_i32_24] : memref<64x128xf32, #tpu.memory_space<any>> -> memref<1x128xf32, #tpu.memory_space<any>>
      %51 = tpu.memref_squeeze %50 : memref<1x128xf32, #tpu.memory_space<any>> -> memref<128xf32, #tpu.memory_space<any>>
      %c0_i32_25 = arith.constant 0 : i32
      %52 = tpu.memref_slice %arg4[%1, %c2_i32_21, %c0_i32_25] : memref<2x8x128xf32, #tpu.memory_space<vmem>> -> memref<1x1x128xf32, #tpu.memory_space<vmem>>
      %53 = tpu.memref_squeeze %52 : memref<1x1x128xf32, #tpu.memory_space<vmem>> -> memref<128xf32, #tpu.memory_space<vmem>>
      %54 = tpu.memref_slice %arg5[%1] : memref<2x!tpu.dma_semaphore, #tpu.memory_space<semaphore_mem>> -> memref<1x!tpu.dma_semaphore, #tpu.memory_space<semaphore_mem>>
      %55 = tpu.memref_squeeze %54 : memref<1x!tpu.dma_semaphore, #tpu.memory_space<semaphore_mem>> -> memref<!tpu.dma_semaphore, #tpu.memory_space<semaphore_mem>>
      tpu.enqueue_dma source(%51 : memref<128xf32, #tpu.memory_space<any>>) target(%53 : memref<128xf32, #tpu.memory_space<vmem>>) target_semaphore(%55 : memref<!tpu.dma_semaphore, #tpu.memory_space<semaphore_mem>>)
      %c3_i32 = arith.constant 3 : i32
      %56 = arith.addi %22, %c3_i32 : i32
      %57 = arith.index_cast %56 : i32 to index
      %58 = memref.load %arg1[%57] : memref<16xi32, #tpu.memory_space<smem>>
      %c0_i32_26 = arith.constant 0 : i32
      %c63_i32_27 = arith.constant 63 : i32
      %59 = arith.maxsi %c0_i32_26, %58 : i32
      %60 = arith.minsi %c63_i32_27, %59 : i32
      %c0_i32_28 = arith.constant 0 : i32
      %61 = tpu.memref_slice %arg2[%60, %c0_i32_28] : memref<64x128xf32, #tpu.memory_space<any>> -> memref<1x128xf32, #tpu.memory_space<any>>
      %62 = tpu.memref_squeeze %61 : memref<1x128xf32, #tpu.memory_space<any>> -> memref<128xf32, #tpu.memory_space<any>>
      %c0_i32_29 = arith.constant 0 : i32
      %63 = tpu.memref_slice %arg4[%1, %c3_i32, %c0_i32_29] : memref<2x8x128xf32, #tpu.memory_space<vmem>> -> memref<1x1x128xf32, #tpu.memory_space<vmem>>
      %64 = tpu.memref_squeeze %63 : memref<1x1x128xf32, #tpu.memory_space<vmem>> -> memref<128xf32, #tpu.memory_space<vmem>>
      %65 = tpu.memref_slice %arg5[%1] : memref<2x!tpu.dma_semaphore, #tpu.memory_space<semaphore_mem>> -> memref<1x!tpu.dma_semaphore, #tpu.memory_space<semaphore_mem>>
      %66 = tpu.memref_squeeze %65 : memref<1x!tpu.dma_semaphore, #tpu.memory_space<semaphore_mem>> -> memref<!tpu.dma_semaphore, #tpu.memory_space<semaphore_mem>>
      tpu.enqueue_dma source(%62 : memref<128xf32, #tpu.memory_space<any>>) target(%64 : memref<128xf32, #tpu.memory_space<vmem>>) target_semaphore(%66 : memref<!tpu.dma_semaphore, #tpu.memory_space<semaphore_mem>>)
      %c4_i32 = arith.constant 4 : i32
      %67 = arith.addi %22, %c4_i32 : i32
      %68 = arith.index_cast %67 : i32 to index
      %69 = memref.load %arg1[%68] : memref<16xi32, #tpu.memory_space<smem>>
      %c0_i32_30 = arith.constant 0 : i32
      %c63_i32_31 = arith.constant 63 : i32
      %70 = arith.maxsi %c0_i32_30, %69 : i32
      %71 = arith.minsi %c63_i32_31, %70 : i32
      %c0_i32_32 = arith.constant 0 : i32
      %72 = tpu.memref_slice %arg2[%71, %c0_i32_32] : memref<64x128xf32, #tpu.memory_space<any>> -> memref<1x128xf32, #tpu.memory_space<any>>
      %73 = tpu.memref_squeeze %72 : memref<1x128xf32, #tpu.memory_space<any>> -> memref<128xf32, #tpu.memory_space<any>>
      %c0_i32_33 = arith.constant 0 : i32
      %74 = tpu.memref_slice %arg4[%1, %c4_i32, %c0_i32_33] : memref<2x8x128xf32, #tpu.memory_space<vmem>> -> memref<1x1x128xf32, #tpu.memory_space<vmem>>
      %75 = tpu.memref_squeeze %74 : memref<1x1x128xf32, #tpu.memory_space<vmem>> -> memref<128xf32, #tpu.memory_space<vmem>>
      %76 = tpu.memref_slice %arg5[%1] : memref<2x!tpu.dma_semaphore, #tpu.memory_space<semaphore_mem>> -> memref<1x!tpu.dma_semaphore, #tpu.memory_space<semaphore_mem>>
      %77 = tpu.memref_squeeze %76 : memref<1x!tpu.dma_semaphore, #tpu.memory_space<semaphore_mem>> -> memref<!tpu.dma_semaphore, #tpu.memory_space<semaphore_mem>>
      tpu.enqueue_dma source(%73 : memref<128xf32, #tpu.memory_space<any>>) target(%75 : memref<128xf32, #tpu.memory_space<vmem>>) target_semaphore(%77 : memref<!tpu.dma_semaphore, #tpu.memory_space<semaphore_mem>>)
      %c5_i32 = arith.constant 5 : i32
      %78 = arith.addi %22, %c5_i32 : i32
      %79 = arith.index_cast %78 : i32 to index
      %80 = memref.load %arg1[%79] : memref<16xi32, #tpu.memory_space<smem>>
      %c0_i32_34 = arith.constant 0 : i32
      %c63_i32_35 = arith.constant 63 : i32
      %81 = arith.maxsi %c0_i32_34, %80 : i32
      %82 = arith.minsi %c63_i32_35, %81 : i32
      %c0_i32_36 = arith.constant 0 : i32
      %83 = tpu.memref_slice %arg2[%82, %c0_i32_36] : memref<64x128xf32, #tpu.memory_space<any>> -> memref<1x128xf32, #tpu.memory_space<any>>
      %84 = tpu.memref_squeeze %83 : memref<1x128xf32, #tpu.memory_space<any>> -> memref<128xf32, #tpu.memory_space<any>>
      %c0_i32_37 = arith.constant 0 : i32
      %85 = tpu.memref_slice %arg4[%1, %c5_i32, %c0_i32_37] : memref<2x8x128xf32, #tpu.memory_space<vmem>> -> memref<1x1x128xf32, #tpu.memory_space<vmem>>
      %86 = tpu.memref_squeeze %85 : memref<1x1x128xf32, #tpu.memory_space<vmem>> -> memref<128xf32, #tpu.memory_space<vmem>>
      %87 = tpu.memref_slice %arg5[%1] : memref<2x!tpu.dma_semaphore, #tpu.memory_space<semaphore_mem>> -> memref<1x!tpu.dma_semaphore, #tpu.memory_space<semaphore_mem>>
      %88 = tpu.memref_squeeze %87 : memref<1x!tpu.dma_semaphore, #tpu.memory_space<semaphore_mem>> -> memref<!tpu.dma_semaphore, #tpu.memory_space<semaphore_mem>>
      tpu.enqueue_dma source(%84 : memref<128xf32, #tpu.memory_space<any>>) target(%86 : memref<128xf32, #tpu.memory_space<vmem>>) target_semaphore(%88 : memref<!tpu.dma_semaphore, #tpu.memory_space<semaphore_mem>>)
      %c6_i32 = arith.constant 6 : i32
      %89 = arith.addi %22, %c6_i32 : i32
      %90 = arith.index_cast %89 : i32 to index
      %91 = memref.load %arg1[%90] : memref<16xi32, #tpu.memory_space<smem>>
      %c0_i32_38 = arith.constant 0 : i32
      %c63_i32_39 = arith.constant 63 : i32
      %92 = arith.maxsi %c0_i32_38, %91 : i32
      %93 = arith.minsi %c63_i32_39, %92 : i32
      %c0_i32_40 = arith.constant 0 : i32
      %94 = tpu.memref_slice %arg2[%93, %c0_i32_40] : memref<64x128xf32, #tpu.memory_space<any>> -> memref<1x128xf32, #tpu.memory_space<any>>
      %95 = tpu.memref_squeeze %94 : memref<1x128xf32, #tpu.memory_space<any>> -> memref<128xf32, #tpu.memory_space<any>>
      %c0_i32_41 = arith.constant 0 : i32
      %96 = tpu.memref_slice %arg4[%1, %c6_i32, %c0_i32_41] : memref<2x8x128xf32, #tpu.memory_space<vmem>> -> memref<1x1x128xf32, #tpu.memory_space<vmem>>
      %97 = tpu.memref_squeeze %96 : memref<1x1x128xf32, #tpu.memory_space<vmem>> -> memref<128xf32, #tpu.memory_space<vmem>>
      %98 = tpu.memref_slice %arg5[%1] : memref<2x!tpu.dma_semaphore, #tpu.memory_space<semaphore_mem>> -> memref<1x!tpu.dma_semaphore, #tpu.memory_space<semaphore_mem>>
      %99 = tpu.memref_squeeze %98 : memref<1x!tpu.dma_semaphore, #tpu.memory_space<semaphore_mem>> -> memref<!tpu.dma_semaphore, #tpu.memory_space<semaphore_mem>>
      tpu.enqueue_dma source(%95 : memref<128xf32, #tpu.memory_space<any>>) target(%97 : memref<128xf32, #tpu.memory_space<vmem>>) target_semaphore(%99 : memref<!tpu.dma_semaphore, #tpu.memory_space<semaphore_mem>>)
      %c7_i32 = arith.constant 7 : i32
      %100 = arith.addi %22, %c7_i32 : i32
      %101 = arith.index_cast %100 : i32 to index
      %102 = memref.load %arg1[%101] : memref<16xi32, #tpu.memory_space<smem>>
      %c0_i32_42 = arith.constant 0 : i32
      %c63_i32_43 = arith.constant 63 : i32
      %103 = arith.maxsi %c0_i32_42, %102 : i32
      %104 = arith.minsi %c63_i32_43, %103 : i32
      %c0_i32_44 = arith.constant 0 : i32
      %105 = tpu.memref_slice %arg2[%104, %c0_i32_44] : memref<64x128xf32, #tpu.memory_space<any>> -> memref<1x128xf32, #tpu.memory_space<any>>
      %106 = tpu.memref_squeeze %105 : memref<1x128xf32, #tpu.memory_space<any>> -> memref<128xf32, #tpu.memory_space<any>>
      %c0_i32_45 = arith.constant 0 : i32
      %107 = tpu.memref_slice %arg4[%1, %c7_i32, %c0_i32_45] : memref<2x8x128xf32, #tpu.memory_space<vmem>> -> memref<1x1x128xf32, #tpu.memory_space<vmem>>
      %108 = tpu.memref_squeeze %107 : memref<1x1x128xf32, #tpu.memory_space<vmem>> -> memref<128xf32, #tpu.memory_space<vmem>>
      %109 = tpu.memref_slice %arg5[%1] : memref<2x!tpu.dma_semaphore, #tpu.memory_space<semaphore_mem>> -> memref<1x!tpu.dma_semaphore, #tpu.memory_space<semaphore_mem>>
      %110 = tpu.memref_squeeze %109 : memref<1x!tpu.dma_semaphore, #tpu.memory_space<semaphore_mem>> -> memref<!tpu.dma_semaphore, #tpu.memory_space<semaphore_mem>>
      tpu.enqueue_dma source(%106 : memref<128xf32, #tpu.memory_space<any>>) target(%108 : memref<128xf32, #tpu.memory_space<vmem>>) target_semaphore(%110 : memref<!tpu.dma_semaphore, #tpu.memory_space<semaphore_mem>>)
      %c8_i32_46 = arith.constant 8 : i32
    } else {
    }
    %c0_i32_4 = arith.constant 0 : i32
    %c0_i32_5 = arith.constant 0 : i32
    %9 = tpu.memref_slice %arg4[%0, %c0_i32_4, %c0_i32_5] : memref<2x8x128xf32, #tpu.memory_space<vmem>> -> memref<1x8x128xf32, #tpu.memory_space<vmem>>
    %10 = tpu.memref_squeeze %9 : memref<1x8x128xf32, #tpu.memory_space<vmem>> -> memref<8x128xf32, #tpu.memory_space<vmem>>
    %c0_i32_6 = arith.constant 0 : i32
    %c0_i32_7 = arith.constant 0 : i32
    %11 = tpu.memref_slice %arg4[%0, %c0_i32_6, %c0_i32_7] : memref<2x8x128xf32, #tpu.memory_space<vmem>> -> memref<1x8x128xf32, #tpu.memory_space<vmem>>
    %12 = tpu.memref_squeeze %11 : memref<1x8x128xf32, #tpu.memory_space<vmem>> -> memref<8x128xf32, #tpu.memory_space<vmem>>
    %13 = tpu.memref_slice %arg5[%0] : memref<2x!tpu.dma_semaphore, #tpu.memory_space<semaphore_mem>> -> memref<1x!tpu.dma_semaphore, #tpu.memory_space<semaphore_mem>>
    %14 = tpu.memref_squeeze %13 : memref<1x!tpu.dma_semaphore, #tpu.memory_space<semaphore_mem>> -> memref<!tpu.dma_semaphore, #tpu.memory_space<semaphore_mem>>
    tpu.wait_dma2 semaphore(%14 : memref<!tpu.dma_semaphore, #tpu.memory_space<semaphore_mem>>) src(%10 : memref<8x128xf32, #tpu.memory_space<vmem>>) dst(%12 : memref<8x128xf32, #tpu.memory_space<vmem>>)
    %15 = arith.index_cast %0 : i32 to index
    %c0 = arith.constant 0 : index
    %c0_8 = arith.constant 0 : index
    %16 = vector.load %arg4[%15, %c0, %c0_8] : memref<2x8x128xf32, #tpu.memory_space<vmem>>, vector<1x8x128xf32>
    %17 = vector.shape_cast %16 : vector<1x8x128xf32> to vector<8x128xf32>
    %cst = arith.constant 11.3137083 : f32
    %18 = vector.broadcast %cst : f32 to vector<8x128xf32>
    %19 = arith.mulf %17, %18 : vector<8x128xf32>
    %c0_9 = arith.constant 0 : index
    %c0_10 = arith.constant 0 : index
    %20 = vector.load %arg3[%c0_9, %c0_10] : memref<8x128xf32, #tpu.memory_space<vmem>>, vector<8x128xf32>
    tpu.vector_store %arg3[%c0_9, %c0_10], %19 {strides = array<i32>} : memref<8x128xf32, #tpu.memory_space<vmem>>, vector<8x128xf32>,
    return
  }
  func.func @transform_1(%arg0: i32, %arg1: memref<16xi32, #tpu.memory_space<smem>>) -> (i32, i32) {
    %c0_i32 = arith.constant 0 : i32
    %c0_i32_0 = arith.constant 0 : i32
    return %arg0, %c0_i32 : i32, i32
  }
}

</mosaic_0001>

<llo_original>
// kernel: tpu_custom_call.1
$region0: #{tpu_custom_call.1}
  #allocation0 [shape = 'u32[]', space=smem, size = 0x4, offset = 0x4, fixed_abs, tag = 'smem constant byte address 0x4 - core index']
  #allocation1 [shape = 'u32[144,128]{1,0:T(1,128)}', space=vmem, size = 0x12000, scoped, tag = 'internal scratch']
  #allocation2 [shape = 'f32[2,8,128]{2,1,0:T(8,128)}', space=vmem, size = 0x2000, scoped, tag = 'scratch operand']
  #allocation3 [shape = 's32[2]{0}', space=sflag, size = 0x8, scoped, tag = 'scratch operand']
  #allocation4 [shape = 's32[1]{0}', space=sflag, size = 0x4, scoped, tag = 'scoped memory for tpu_custom_call.1']
  #allocation5 [shape = 'u8[512]{0}', space=smem, size = 0x200, scoped, tag = 'prefetched SMEM operand 0']
  #allocation8 [shape = 's32[]', space=sflag, size = 0x4, offset = 0, fixed_abs, tag = 'sflag constant byte address 0x0 - dummy sync flag']
  #allocation9 [shape = 's32[]', space=sflag, size = 0x4, offset = 0, fixed_abs, tag = 'sflag constant byte address 0x0 - dummy sync flag']
  #allocation10 [shape = 'u32[]', space=smem, size = 0x4, offset = 0x44, fixed_abs, tag = 'smem constant byte address 0x44 - assertion arg 0']
  #allocation11 [shape = 'u32[]', space=smem, size = 0x4, offset = 0x48, fixed_abs, tag = 'smem constant byte address 0x48 - assertion arg 1']
  #allocation12 [shape = 's32[]', space=sflag, size = 0x4, offset = 0, fixed_abs, tag = 'sflag constant byte address 0x0 - dummy sync flag']
  #allocation13 [shape = 's32[]', space=sflag, size = 0x4, offset = 0, fixed_abs, tag = 'sflag constant byte address 0x0 - dummy sync flag']
  #allocation14 [shape = 's32[]', space=sflag, size = 0x4, offset = 0, fixed_abs, tag = 'sflag constant byte address 0x0 - dummy sync flag']
  #allocation15 [shape = 's32[]', space=sflag, size = 0x4, offset = 0, fixed_abs, tag = 'sflag constant byte address 0x0 - dummy sync flag']
  #allocation16 [shape = 's32[]', space=sflag, size = 0x4, offset = 0, fixed_abs, tag = 'sflag constant byte address 0x0 - dummy sync flag']
  #allocation17 [shape = 's32[]', space=sflag, size = 0x4, offset = 0, fixed_abs, tag = 'sflag constant byte address 0x0 - dummy sync flag']
  #allocation18 [shape = 's32[]', space=sflag, size = 0x4, offset = 0, fixed_abs, tag = 'sflag constant byte address 0x0 - dummy sync flag']
  #allocation19 [shape = 's32[]', space=sflag, size = 0x4, offset = 0, fixed_abs, tag = 'sflag constant byte address 0x0 - dummy sync flag']
  #allocation20 [shape = 's32[]', space=sflag, size = 0x4, offset = 0, fixed_abs, tag = 'sflag constant byte address 0x0 - dummy sync flag']
  #allocation21 [shape = 's32[]', space=sflag, size = 0x4, offset = 0, fixed_abs, tag = 'sflag constant byte address 0x0 - dummy sync flag']
  #allocation22 [shape = 's32[]', space=sflag, size = 0x4, offset = 0, fixed_abs, tag = 'sflag constant byte address 0x0 - dummy sync flag']
  #allocation23 [shape = 's32[]', space=sflag, size = 0x4, offset = 0, fixed_abs, tag = 'sflag constant byte address 0x0 - dummy sync flag']
  #allocation24 [shape = 's32[]', space=sflag, size = 0x4, offset = 0, fixed_abs, tag = 'sflag constant byte address 0x0 - dummy sync flag']
  #allocation25 [shape = 's32[]', space=sflag, size = 0x4, offset = 0, fixed_abs, tag = 'sflag constant byte address 0x0 - dummy sync flag']
  #allocation26 [shape = 's32[]', space=sflag, size = 0x4, offset = 0, fixed_abs, tag = 'sflag constant byte address 0x0 - dummy sync flag']
  #allocation27 [shape = 's32[]', space=sflag, size = 0x4, offset = 0, fixed_abs, tag = 'sflag constant byte address 0x0 - dummy sync flag']
  #allocation28 [shape = 's32[]', space=sflag, size = 0x4, offset = 0, fixed_abs, tag = 'sflag constant byte address 0x0 - dummy sync flag']
  #allocation29 [shape = 's32[]', space=sflag, size = 0x4, offset = 0, fixed_abs, tag = 'sflag constant byte address 0x0 - dummy sync flag']
  #allocation30 [shape = 's32[]', space=sflag, size = 0x4, offset = 0, fixed_abs, tag = 'sflag constant byte address 0x0 - dummy sync flag']
  #allocation31 [shape = 's32[]', space=sflag, size = 0x4, offset = 0, fixed_abs, tag = 'sflag constant byte address 0x0 - dummy sync flag']
  #allocation32 [shape = 's32[]', space=sflag, size = 0x4, offset = 0, fixed_abs, tag = 'sflag constant byte address 0x0 - dummy sync flag']
  #allocation33 [shape = 's32[]', space=sflag, size = 0x4, offset = 0, fixed_abs, tag = 'sflag constant byte address 0x0 - dummy sync flag']
  #allocation34 [shape = 's32[]', space=sflag, size = 0x4, offset = 0, fixed_abs, tag = 'sflag constant byte address 0x0 - dummy sync flag']
  #allocation35 [shape = 's32[]', space=sflag, size = 0x4, offset = 0, fixed_abs, tag = 'sflag constant byte address 0x0 - dummy sync flag']
  #allocation36 [shape = 's32[]', space=sflag, size = 0x4, offset = 0, fixed_abs, tag = 'sflag constant byte address 0x0 - dummy sync flag']
  #allocation37 [shape = 's32[]', space=sflag, size = 0x4, offset = 0, fixed_abs, tag = 'sflag constant byte address 0x0 - dummy sync flag']
  #allocation38 [shape = 's32[]', space=sflag, size = 0x4, offset = 0, fixed_abs, tag = 'sflag constant byte address 0x0 - dummy sync flag']
  #allocation39 [shape = 's32[]', space=sflag, size = 0x4, offset = 0, fixed_abs, tag = 'sflag constant byte address 0x0 - dummy sync flag']
  #allocation40 [shape = 's32[]', space=sflag, size = 0x4, offset = 0, fixed_abs, tag = 'sflag constant byte address 0x0 - dummy sync flag']
  #allocation41 [shape = 's32[]', space=sflag, size = 0x4, offset = 0, fixed_abs, tag = 'sflag constant byte address 0x0 - dummy sync flag']
  %s0 = inlined_call_operand.hbm [shape: s32[16], index: 0, kind: input, shape index: {}]
  %s1 = inlined_call_operand.hbm [shape: f32[64,128], index: 1, kind: input, shape index: {}]
  %s2 = inlined_call_operand.hbm [shape: f32[16,128], index: 2, kind: output, shape index: {}]
  %s3 = sld [smem:[#allocation0]]
  $region97: #{tpu_custom_call.1} parent=0
    _
  %s5 = ssub.s32 1, %s3
  %s6 = scalar_select 0, %s5, %s3
  %8 = dma.hbm_to_smem %s0, 16, [#allocation5], [#allocation4]
  %9 = dma.done [#allocation4], 16
  %10 = sfence
  $region1: #{tpu_custom_call.1} parent=0
    #allocation6 [shape = 'u8[8192]{0}', space=vmem, size = 0x2000, scoped, tag = 'output window, operand 0']
    #allocation7 [shape = 's32[2]{0}', space=sflag, size = 0x8, scoped, tag = 'scoped memory for tpu_custom_call.1']
    %11 = vsyncpa [#allocation7], 0
    %s12 = scalar_lea.sflag [#allocation7], 1
    %13 = vsyncpa %s12, 0
    loop: start=0, step=1, limit=3
    $region2: #{tpu_custom_call.1} parent=1 // loop_pre_header
      _
    $region3: #{tpu_custom_call.1} parent=1 // loop_header
      %s15 = sphi 0, %s19
      %p16 = scmp.ge.s32.totalorder %s15, 3
      %s24 = sphi 0, %s26
      %s27 = sphi 0, %s24
      %s37 = sphi 0, %s27
    $region4: #{tpu_custom_call.1} parent=1 // loop_header_branch
      %18 = sbr.rel (%p16) target = $region8
    $region5: #{tpu_custom_call.1} parent=1 // loop_body
      %s20 = ssub.s32 %s15, 1
      %s21 = sadd.s32 %s15, 1
      %s22 = ssub.s32 %s15, %s21
      %p23 = scmp.eq.s32.totalorder %s22, 0
      %s25 = sadd.s32 %s24, 1
      %s26 = scalar_select %p23, %s24, %s25
      %p28 = pneg %p23
      %p29 = scmp.eq.s32.totalorder %s15, 1
      %p30 = por %p28, %p29
      %p31 = scmp.ne.s32.totalorder %s24, %s27
      %p32 = scmp.eq.s32.totalorder %s15, 0
      %p33 = por %p31, %p32
      %p34 = scmp.ne.s32.totalorder %s24, %s27
      %p35 = scmp.eq.s32.totalorder %s20, 1
      %p36 = por %p34, %p35
      %p38 = scmp.ne.s32.totalorder %s27, %s37
      %p39 = scmp.eq.s32.totalorder %s20, 0
      %p40 = por %p38, %p39
      %p41 = scmp.lt.s32.totalorder %s15, 2
      // Predicated region
      $region9: #{tpu_custom_call.1} parent=5 // pred_check
        %p42 = pneg %p41
      $region10: #{tpu_custom_call.1} parent=5 // pred_check_branch
        %44 = sbr.rel (%p42) target = $region12
      $region11: #{tpu_custom_call.1} parent=5 // pred_region
        %p45 = pneg %p33
        %p46 = pneg %p30
        %s47 = sand.u32 %s24, 1
        %s48 = scalar_lea.sflag [#allocation7], %s47
        %s49 = sand.u32 %s24, 1
        %s50 = smul.addr %s49, 8
        %s51 = scalar_lea.vmem [#allocation6], %s50
        %p52 = scmp.lt.s32.totalorder %s15, 0
        %s53 = ssub.s32 0, %s15
        %s54 = scalar_select %p52, %s53, %s15
        %s55 = sand.u32 %s54, 1
        %s56 = ssub.s32 0, %s55
        %s57 = scalar_select %p52, %s56, %s55
        %s58 = ssub.s32 1, %s57
        %p59 = scmp.eq.s32.totalorder %s15, 0
        // Predicated region
        $region13: #{tpu_custom_call.1} parent=11 // pred_check
          %p60 = pneg %p59
        $region14: #{tpu_custom_call.1} parent=11 // pred_check_branch
          %62 = sbr.rel (%p60) target = $region16
        $region15: #{tpu_custom_call.1} parent=11 // pred_region
          %s63 = smul.u32 %s15, 8
          %s64 = sld [smem:[#allocation5 + %s63]]
          %p65 = scmp.gt.s32.totalorder %s64, 0
          %s66 = scalar_select %p65, %s64, 0
          %p67 = scmp.lt.s32.totalorder %s66, 63
          %s68 = scalar_select %p67, %s66, 63
          %s69 = smul.addr %s68, 16
          %s70 = scalar_lea.hbm %s1, %s69
          %s71 = smul.u32 %s57, 8
          %s72 = scalar_lea.vmem [#allocation2], %s71
          %s73 = scalar_lea.sflag [#allocation3], %s57
          // Predicated region
          $region17: #{tpu_custom_call.1} parent=15 // pred_check
            _
          $region18: #{tpu_custom_call.1} parent=15 // pred_check_branch
            %75 = sbr.rel target = $region20
          $region19: #{tpu_custom_call.1} parent=15 // pred_region
            %76 = sst [smem:[#allocation10]] [#allocation9]
            %77 = sst [smem:[#allocation11]] [#allocation8]
          $region20: #{tpu_custom_call.1} parent=15 // pred_fallthru
            _
          %79 = shalt.err (0)
          %s81 = sshll.u32 %s72, 4
          %s82 = int_to_ptr.vmem [resolvable:$true] %s81
          %84 = dma.hbm_to_vmem [thread:$0]  %s70, 16, %s82, %s73
          %s85 = sadd.s32 %s63, 1
          %s86 = sld [smem:[#allocation5 + %s85]]
          %p87 = scmp.gt.s32.totalorder %s86, 0
          %s88 = scalar_select %p87, %s86, 0
          %p89 = scmp.lt.s32.totalorder %s88, 63
          %s90 = scalar_select %p89, %s88, 63
          %s91 = smul.addr %s90, 16
          %s92 = scalar_lea.hbm %s1, %s91
          %s93 = sadd.s32 1, %s71
          %s94 = scalar_lea.vmem [#allocation2], %s93
          // Predicated region
          $region21: #{tpu_custom_call.1} parent=15 // pred_check
            _
          $region22: #{tpu_custom_call.1} parent=15 // pred_check_branch
            %96 = sbr.rel target = $region24
          $region23: #{tpu_custom_call.1} parent=15 // pred_region
            %97 = sst [smem:[#allocation10]] [#allocation13]
            %98 = sst [smem:[#allocation11]] [#allocation12]
          $region24: #{tpu_custom_call.1} parent=15 // pred_fallthru
            _
          %100 = shalt.err (0)
          %s102 = sshll.u32 %s94, 4
          %s103 = int_to_ptr.vmem [resolvable:$true] %s102
          %105 = dma.hbm_to_vmem [thread:$0]  %s92, 16, %s103, %s73
          %s106 = sadd.s32 %s63, 2
          %s107 = sld [smem:[#allocation5 + %s106]]
          %p108 = scmp.gt.s32.totalorder %s107, 0
          %s109 = scalar_select %p108, %s107, 0
          %p110 = scmp.lt.s32.totalorder %s109, 63
          %s111 = scalar_select %p110, %s109, 63
          %s112 = smul.addr %s111, 16
          %s113 = scalar_lea.hbm %s1, %s112
          %s114 = sadd.s32 2, %s71
          %s115 = scalar_lea.vmem [#allocation2], %s114
          // Predicated region
          $region25: #{tpu_custom_call.1} parent=15 // pred_check
            _
          $region26: #{tpu_custom_call.1} parent=15 // pred_check_branch
            %117 = sbr.rel target = $region28
          $region27: #{tpu_custom_call.1} parent=15 // pred_region
            %118 = sst [smem:[#allocation10]] [#allocation15]
            %119 = sst [smem:[#allocation11]] [#allocation14]
          $region28: #{tpu_custom_call.1} parent=15 // pred_fallthru
            _
          %121 = shalt.err (0)
          %s123 = sshll.u32 %s115, 4
          %s124 = int_to_ptr.vmem [resolvable:$true] %s123
          %126 = dma.hbm_to_vmem [thread:$0]  %s113, 16, %s124, %s73
          %s127 = sadd.s32 %s63, 3
          %s128 = sld [smem:[#allocation5 + %s127]]
          %p129 = scmp.gt.s32.totalorder %s128, 0
          %s130 = scalar_select %p129, %s128, 0
          %p131 = scmp.lt.s32.totalorder %s130, 63
          %s132 = scalar_select %p131, %s130, 63
          %s133 = smul.addr %s132, 16
          %s134 = scalar_lea.hbm %s1, %s133
          %s135 = sadd.s32 3, %s71
          %s136 = scalar_lea.vmem [#allocation2], %s135
          // Predicated region
          $region29: #{tpu_custom_call.1} parent=15 // pred_check
            _
          $region30: #{tpu_custom_call.1} parent=15 // pred_check_branch
            %138 = sbr.rel target = $region32
          $region31: #{tpu_custom_call.1} parent=15 // pred_region
            %139 = sst [smem:[#allocation10]] [#allocation17]
            %140 = sst [smem:[#allocation11]] [#allocation16]
          $region32: #{tpu_custom_call.1} parent=15 // pred_fallthru
            _
          %142 = shalt.err (0)
          %s144 = sshll.u32 %s136, 4
          %s145 = int_to_ptr.vmem [resolvable:$true] %s144
          %147 = dma.hbm_to_vmem [thread:$0]  %s134, 16, %s145, %s73
          %s148 = sadd.s32 %s63, 4
          %s149 = sld [smem:[#allocation5 + %s148]]
          %p150 = scmp.gt.s32.totalorder %s149, 0
          %s151 = scalar_select %p150, %s149, 0
          %p152 = scmp.lt.s32.totalorder %s151, 63
          %s153 = scalar_select %p152, %s151, 63
          %s154 = smul.addr %s153, 16
          %s155 = scalar_lea.hbm %s1, %s154
          %s156 = sadd.s32 4, %s71
          %s157 = scalar_lea.vmem [#allocation2], %s156
          // Predicated region
          $region33: #{tpu_custom_call.1} parent=15 // pred_check
            _
          $region34: #{tpu_custom_call.1} parent=15 // pred_check_branch
            %159 = sbr.rel target = $region36
          $region35: #{tpu_custom_call.1} parent=15 // pred_region
            %160 = sst [smem:[#allocation10]] [#allocation19]
            %161 = sst [smem:[#allocation11]] [#allocation18]
          $region36: #{tpu_custom_call.1} parent=15 // pred_fallthru
            _
          %163 = shalt.err (0)
          %s165 = sshll.u32 %s157, 4
          %s166 = int_to_ptr.vmem [resolvable:$true] %s165
          %168 = dma.hbm_to_vmem [thread:$0]  %s155, 16, %s166, %s73
          %s169 = sadd.s32 %s63, 5
          %s170 = sld [smem:[#allocation5 + %s169]]
          %p171 = scmp.gt.s32.totalorder %s170, 0
          %s172 = scalar_select %p171, %s170, 0
          %p173 = scmp.lt.s32.totalorder %s172, 63
          %s174 = scalar_select %p173, %s172, 63
          %s175 = smul.addr %s174, 16
          %s176 = scalar_lea.hbm %s1, %s175
          %s177 = sadd.s32 5, %s71
          %s178 = scalar_lea.vmem [#allocation2], %s177
          // Predicated region
          $region37: #{tpu_custom_call.1} parent=15 // pred_check
            _
          $region38: #{tpu_custom_call.1} parent=15 // pred_check_branch
            %180 = sbr.rel target = $region40
          $region39: #{tpu_custom_call.1} parent=15 // pred_region
            %181 = sst [smem:[#allocation10]] [#allocation21]
            %182 = sst [smem:[#allocation11]] [#allocation20]
          $region40: #{tpu_custom_call.1} parent=15 // pred_fallthru
            _
          %184 = shalt.err (0)
          %s186 = sshll.u32 %s178, 4
          %s187 = int_to_ptr.vmem [resolvable:$true] %s186
          %189 = dma.hbm_to_vmem [thread:$0]  %s176, 16, %s187, %s73
          %s190 = sadd.s32 %s63, 6
          %s191 = sld [smem:[#allocation5 + %s190]]
          %p192 = scmp.gt.s32.totalorder %s191, 0
          %s193 = scalar_select %p192, %s191, 0
          %p194 = scmp.lt.s32.totalorder %s193, 63
          %s195 = scalar_select %p194, %s193, 63
          %s196 = smul.addr %s195, 16
          %s197 = scalar_lea.hbm %s1, %s196
          %s198 = sadd.s32 6, %s71
          %s199 = scalar_lea.vmem [#allocation2], %s198
          // Predicated region
          $region41: #{tpu_custom_call.1} parent=15 // pred_check
            _
          $region42: #{tpu_custom_call.1} parent=15 // pred_check_branch
            %201 = sbr.rel target = $region44
          $region43: #{tpu_custom_call.1} parent=15 // pred_region
            %202 = sst [smem:[#allocation10]] [#allocation23]
            %203 = sst [smem:[#allocation11]] [#allocation22]
          $region44: #{tpu_custom_call.1} parent=15 // pred_fallthru
            _
          %205 = shalt.err (0)
          %s207 = sshll.u32 %s199, 4
          %s208 = int_to_ptr.vmem [resolvable:$true] %s207
          %210 = dma.hbm_to_vmem [thread:$0]  %s197, 16, %s208, %s73
          %s211 = sadd.s32 %s63, 7
          %s212 = sld [smem:[#allocation5 + %s211]]
          %p213 = scmp.gt.s32.totalorder %s212, 0
          %s214 = scalar_select %p213, %s212, 0
          %p215 = scmp.lt.s32.totalorder %s214, 63
          %s216 = scalar_select %p215, %s214, 63
          %s217 = smul.addr %s216, 16
          %s218 = scalar_lea.hbm %s1, %s217
          %s219 = sadd.s32 7, %s71
          %s220 = scalar_lea.vmem [#allocation2], %s219
          // Predicated region
          $region45: #{tpu_custom_call.1} parent=15 // pred_check
            _
          $region46: #{tpu_custom_call.1} parent=15 // pred_check_branch
            %222 = sbr.rel target = $region48
          $region47: #{tpu_custom_call.1} parent=15 // pred_region
            %223 = sst [smem:[#allocation10]] [#allocation25]
            %224 = sst [smem:[#allocation11]] [#allocation24]
          $region48: #{tpu_custom_call.1} parent=15 // pred_fallthru
            _
          %226 = shalt.err (0)
          %s228 = sshll.u32 %s220, 4
          %s229 = int_to_ptr.vmem [resolvable:$true] %s228
          %231 = dma.hbm_to_vmem [thread:$0]  %s218, 16, %s229, %s73
        $region16: #{tpu_custom_call.1} parent=11 // pred_fallthru
          _
        %s232 = sadd.s32 %s15, 1
        %p233 = scmp.lt.s32.totalorder %s232, 2
        // Predicated region
        $region49: #{tpu_custom_call.1} parent=11 // pred_check
          %p234 = pneg %p233
        $region50: #{tpu_custom_call.1} parent=11 // pred_check_branch
          %236 = sbr.rel (%p234) target = $region52
        $region51: #{tpu_custom_call.1} parent=11 // pred_region
          %s237 = smul.u32 %s232, 8
          %s238 = sld [smem:[#allocation5 + %s237]]
          %p239 = scmp.gt.s32.totalorder %s238, 0
          %s240 = scalar_select %p239, %s238, 0
          %p241 = scmp.lt.s32.totalorder %s240, 63
          %s242 = scalar_select %p241, %s240, 63
          %s243 = smul.addr %s242, 16
          %s244 = scalar_lea.hbm %s1, %s243
          %s245 = smul.u32 %s58, 8
          %s246 = scalar_lea.vmem [#allocation2], %s245
          %s247 = scalar_lea.sflag [#allocation3], %s58
          // Predicated region
          $region53: #{tpu_custom_call.1} parent=51 // pred_check
            _
          $region54: #{tpu_custom_call.1} parent=51 // pred_check_branch
            %249 = sbr.rel target = $region56
          $region55: #{tpu_custom_call.1} parent=51 // pred_region
            %250 = sst [smem:[#allocation10]] [#allocation27]
            %251 = sst [smem:[#allocation11]] [#allocation26]
          $region56: #{tpu_custom_call.1} parent=51 // pred_fallthru
            _
          %253 = shalt.err (0)
          %s255 = sshll.u32 %s246, 4
          %s256 = int_to_ptr.vmem [resolvable:$true] %s255
          %258 = dma.hbm_to_vmem [thread:$0]  %s244, 16, %s256, %s247
          %s259 = sadd.s32 %s237, 1
          %s260 = sld [smem:[#allocation5 + %s259]]
          %p261 = scmp.gt.s32.totalorder %s260, 0
          %s262 = scalar_select %p261, %s260, 0
          %p263 = scmp.lt.s32.totalorder %s262, 63
          %s264 = scalar_select %p263, %s262, 63
          %s265 = smul.addr %s264, 16
          %s266 = scalar_lea.hbm %s1, %s265
          %s267 = sadd.s32 1, %s245
          %s268 = scalar_lea.vmem [#allocation2], %s267
          // Predicated region
          $region57: #{tpu_custom_call.1} parent=51 // pred_check
            _
          $region58: #{tpu_custom_call.1} parent=51 // pred_check_branch
            %270 = sbr.rel target = $region60
          $region59: #{tpu_custom_call.1} parent=51 // pred_region
            %271 = sst [smem:[#allocation10]] [#allocation29]
            %272 = sst [smem:[#allocation11]] [#allocation28]
          $region60: #{tpu_custom_call.1} parent=51 // pred_fallthru
            _
          %274 = shalt.err (0)
          %s276 = sshll.u32 %s268, 4
          %s277 = int_to_ptr.vmem [resolvable:$true] %s276
          %279 = dma.hbm_to_vmem [thread:$0]  %s266, 16, %s277, %s247
          %s280 = sadd.s32 %s237, 2
          %s281 = sld [smem:[#allocation5 + %s280]]
          %p282 = scmp.gt.s32.totalorder %s281, 0
          %s283 = scalar_select %p282, %s281, 0
          %p284 = scmp.lt.s32.totalorder %s283, 63
          %s285 = scalar_select %p284, %s283, 63
          %s286 = smul.addr %s285, 16
          %s287 = scalar_lea.hbm %s1, %s286
          %s288 = sadd.s32 2, %s245
          %s289 = scalar_lea.vmem [#allocation2], %s288
          // Predicated region
          $region61: #{tpu_custom_call.1} parent=51 // pred_check
            _
          $region62: #{tpu_custom_call.1} parent=51 // pred_check_branch
            %291 = sbr.rel target = $region64
          $region63: #{tpu_custom_call.1} parent=51 // pred_region
            %292 = sst [smem:[#allocation10]] [#allocation31]
            %293 = sst [smem:[#allocation11]] [#allocation30]
          $region64: #{tpu_custom_call.1} parent=51 // pred_fallthru
            _
          %295 = shalt.err (0)
          %s297 = sshll.u32 %s289, 4
          %s298 = int_to_ptr.vmem [resolvable:$true] %s297
          %300 = dma.hbm_to_vmem [thread:$0]  %s287, 16, %s298, %s247
          %s301 = sadd.s32 %s237, 3
          %s302 = sld [smem:[#allocation5 + %s301]]
          %p303 = scmp.gt.s32.totalorder %s302, 0
          %s304 = scalar_select %p303, %s302, 0
          %p305 = scmp.lt.s32.totalorder %s304, 63
          %s306 = scalar_select %p305, %s304, 63
          %s307 = smul.addr %s306, 16
          %s308 = scalar_lea.hbm %s1, %s307
          %s309 = sadd.s32 3, %s245
          %s310 = scalar_lea.vmem [#allocation2], %s309
          // Predicated region
          $region65: #{tpu_custom_call.1} parent=51 // pred_check
            _
          $region66: #{tpu_custom_call.1} parent=51 // pred_check_branch
            %312 = sbr.rel target = $region68
          $region67: #{tpu_custom_call.1} parent=51 // pred_region
            %313 = sst [smem:[#allocation10]] [#allocation33]
            %314 = sst [smem:[#allocation11]] [#allocation32]
          $region68: #{tpu_custom_call.1} parent=51 // pred_fallthru
            _
          %316 = shalt.err (0)
          %s318 = sshll.u32 %s310, 4
          %s319 = int_to_ptr.vmem [resolvable:$true] %s318
          %321 = dma.hbm_to_vmem [thread:$0]  %s308, 16, %s319, %s247
          %s322 = sadd.s32 %s237, 4
          %s323 = sld [smem:[#allocation5 + %s322]]
          %p324 = scmp.gt.s32.totalorder %s323, 0
          %s325 = scalar_select %p324, %s323, 0
          %p326 = scmp.lt.s32.totalorder %s325, 63
          %s327 = scalar_select %p326, %s325, 63
          %s328 = smul.addr %s327, 16
          %s329 = scalar_lea.hbm %s1, %s328
          %s330 = sadd.s32 4, %s245
          %s331 = scalar_lea.vmem [#allocation2], %s330
          // Predicated region
          $region69: #{tpu_custom_call.1} parent=51 // pred_check
            _
          $region70: #{tpu_custom_call.1} parent=51 // pred_check_branch
            %333 = sbr.rel target = $region72
          $region71: #{tpu_custom_call.1} parent=51 // pred_region
            %334 = sst [smem:[#allocation10]] [#allocation35]
            %335 = sst [smem:[#allocation11]] [#allocation34]
          $region72: #{tpu_custom_call.1} parent=51 // pred_fallthru
            _
          %337 = shalt.err (0)
          %s339 = sshll.u32 %s331, 4
          %s340 = int_to_ptr.vmem [resolvable:$true] %s339
          %342 = dma.hbm_to_vmem [thread:$0]  %s329, 16, %s340, %s247
          %s343 = sadd.s32 %s237, 5
          %s344 = sld [smem:[#allocation5 + %s343]]
          %p345 = scmp.gt.s32.totalorder %s344, 0
          %s346 = scalar_select %p345, %s344, 0
          %p347 = scmp.lt.s32.totalorder %s346, 63
          %s348 = scalar_select %p347, %s346, 63
          %s349 = smul.addr %s348, 16
          %s350 = scalar_lea.hbm %s1, %s349
          %s351 = sadd.s32 5, %s245
          %s352 = scalar_lea.vmem [#allocation2], %s351
          // Predicated region
          $region73: #{tpu_custom_call.1} parent=51 // pred_check
            _
          $region74: #{tpu_custom_call.1} parent=51 // pred_check_branch
            %354 = sbr.rel target = $region76
          $region75: #{tpu_custom_call.1} parent=51 // pred_region
            %355 = sst [smem:[#allocation10]] [#allocation37]
            %356 = sst [smem:[#allocation11]] [#allocation36]
          $region76: #{tpu_custom_call.1} parent=51 // pred_fallthru
            _
          %358 = shalt.err (0)
          %s360 = sshll.u32 %s352, 4
          %s361 = int_to_ptr.vmem [resolvable:$true] %s360
          %363 = dma.hbm_to_vmem [thread:$0]  %s350, 16, %s361, %s247
          %s364 = sadd.s32 %s237, 6
          %s365 = sld [smem:[#allocation5 + %s364]]
          %p366 = scmp.gt.s32.totalorder %s365, 0
          %s367 = scalar_select %p366, %s365, 0
          %p368 = scmp.lt.s32.totalorder %s367, 63
          %s369 = scalar_select %p368, %s367, 63
          %s370 = smul.addr %s369, 16
          %s371 = scalar_lea.hbm %s1, %s370
          %s372 = sadd.s32 6, %s245
          %s373 = scalar_lea.vmem [#allocation2], %s372
          // Predicated region
          $region77: #{tpu_custom_call.1} parent=51 // pred_check
            _
          $region78: #{tpu_custom_call.1} parent=51 // pred_check_branch
            %375 = sbr.rel target = $region80
          $region79: #{tpu_custom_call.1} parent=51 // pred_region
            %376 = sst [smem:[#allocation10]] [#allocation39]
            %377 = sst [smem:[#allocation11]] [#allocation38]
          $region80: #{tpu_custom_call.1} parent=51 // pred_fallthru
            _
          %379 = shalt.err (0)
          %s381 = sshll.u32 %s373, 4
          %s382 = int_to_ptr.vmem [resolvable:$true] %s381
          %384 = dma.hbm_to_vmem [thread:$0]  %s371, 16, %s382, %s247
          %s385 = sadd.s32 %s237, 7
          %s386 = sld [smem:[#allocation5 + %s385]]
          %p387 = scmp.gt.s32.totalorder %s386, 0
          %s388 = scalar_select %p387, %s386, 0
          %p389 = scmp.lt.s32.totalorder %s388, 63
          %s390 = scalar_select %p389, %s388, 63
          %s391 = smul.addr %s390, 16
          %s392 = scalar_lea.hbm %s1, %s391
          %s393 = sadd.s32 7, %s245
          %s394 = scalar_lea.vmem [#allocation2], %s393
          // Predicated region
          $region81: #{tpu_custom_call.1} parent=51 // pred_check
            _
          $region82: #{tpu_custom_call.1} parent=51 // pred_check_branch
            %396 = sbr.rel target = $region84
          $region83: #{tpu_custom_call.1} parent=51 // pred_region
            %397 = sst [smem:[#allocation10]] [#allocation41]
            %398 = sst [smem:[#allocation11]] [#allocation40]
          $region84: #{tpu_custom_call.1} parent=51 // pred_fallthru
            _
          %400 = shalt.err (0)
          %s402 = sshll.u32 %s394, 4
          %s403 = int_to_ptr.vmem [resolvable:$true] %s402
          %405 = dma.hbm_to_vmem [thread:$0]  %s392, 16, %s403, %s247
        $region52: #{tpu_custom_call.1} parent=11 // pred_fallthru
          _
        %s406 = smul.u32 %s57, 8
        %s407 = scalar_lea.vmem [#allocation2], %s406
        %s408 = scalar_lea.sflag [#allocation3], %s57
        %s409 = smul.u32 8, 1
        %s410 = sshll.u32 %s409, 4
        %411 = dma.done %s408, %s410
        %v412 = vld [vmem:[%s407] sm:$0xff]
        %v413 = vmul.f32 %v412, 11.313708
        %414 = vst [vmem:[%s51] sm:$0xff] %v413
        %s415 = sand.u32 %s24, 1
        %s416 = scalar_lea.sflag [#allocation7], %s415
        %s417 = sand.u32 %s24, 1
        %s418 = smul.addr %s417, 8
        %s419 = scalar_lea.vmem [#allocation6], %s418
        // Predicated region
        $region85: #{tpu_custom_call.1} parent=11 // pred_check
          %p420 = pneg %p30
        $region86: #{tpu_custom_call.1} parent=11 // pred_check_branch
          %422 = sbr.rel (%p420) target = $region88
        $region87: #{tpu_custom_call.1} parent=11 // pred_region
          %s424 = ssub.s32 128, 128
          %425 = vsyncadd %s416, %s424
          %s426 = smul.addr %s15, 128
          %s427 = scalar_lea.hbm %s2, %s426
          %s429 = sshll.u32 %s419, 4
          %s430 = int_to_ptr.vmem [resolvable:$true] %s429
          %432 = dma.vmem_to_hbm [thread:$0]  %s430, 128, %s427, %s416
        $region88: #{tpu_custom_call.1} parent=11 // pred_fallthru
          _
      $region12: #{tpu_custom_call.1} parent=5 // pred_fallthru
        _
      %p433 = scmp.le.s32.totalorder 1, %s15
      // Predicated region
      $region89: #{tpu_custom_call.1} parent=5 // pred_check
        %p434 = pneg %p433
      $region90: #{tpu_custom_call.1} parent=5 // pred_check_branch
        %436 = sbr.rel (%p434) target = $region92
      $region91: #{tpu_custom_call.1} parent=5 // pred_region
        %s437 = ssub.s32 %s15, 1
        // Predicated region
        $region93: #{tpu_custom_call.1} parent=91 // pred_check
          %p438 = pneg %p36
        $region94: #{tpu_custom_call.1} parent=91 // pred_check_branch
          %440 = sbr.rel (%p438) target = $region96
        $region95: #{tpu_custom_call.1} parent=91 // pred_region
          %s441 = sand.u32 %s27, 1
          %s442 = scalar_lea.sflag [#allocation7], %s441
          %s443 = sand.u32 %s27, 1
          %s444 = smul.addr %s443, 8
          %s445 = scalar_lea.vmem [#allocation6], %s444
          %446 = dma.done %s442, 128
        $region96: #{tpu_custom_call.1} parent=91 // pred_fallthru
          _
      $region92: #{tpu_custom_call.1} parent=5 // pred_fallthru
        _
    $region6: #{tpu_custom_call.1} parent=1 // loop_footer
      %s19 = sadd.s32 1, %s15
    $region7: #{tpu_custom_call.1} parent=1 // loop_footer_branch
      %14 = sbr.rel target = $region3
    $region8: #{tpu_custom_call.1} parent=1 // loop_exit
      _
    %447 = vsyncpa [#allocation7], 1
    %s448 = scalar_lea.sflag [#allocation7], 1
    %449 = vsyncpa %s448, 1
  %450 = vsyncmov [#allocation3]
  %s451 = vpop.sfrf %450
  %p452 = scmp.eq.s32.totalorder %s451, 0
  %p453 = pneg %p452
  %455 = shalt.err (%p453)
  %s456 = scalar_lea.sflag [#allocation3], 1
  %457 = vsyncmov %s456
  %s458 = vpop.sfrf %457
  %p459 = scmp.eq.s32.totalorder %s458, 0
  %p460 = pneg %p459
  %462 = shalt.err (%p460)

</llo_original>
